<compile_context>
chip_gen: v7x
topology: tpu7x:2x2x1
jax: 0.10.0
libtpu: 0.0.40
codegen_flags: <defaults>
</compile_context>

<pallas_src>
import functools
import math

import jax
import jax.numpy as jnp
from jax.experimental import pallas as pl
from jax.experimental.pallas import tpu as pltpu


def _round_up(n, m):
    return (n + m - 1) // m * m


# ----------------------------------------------------------------------------
# Kernel: one activation operand, one packed weight/bias slab, one dense output.
# ----------------------------------------------------------------------------
def qnetwork_kernel(x_ref, slab_ref, out_ref, *, d_in, h2, r_w1, r_w2, r_w3, r_b):
    dt = slab_ref.dtype
    x = x_ref[...]

    # Layer 1 (both heads fused): [TB, d_in] @ [d_in, 2H]
    h = jnp.dot(x, slab_ref[r_w1:r_w1 + d_in, 0:h2],
                preferred_element_type=jnp.float32)
    h = h + slab_ref[r_b:r_b + 1, 0:h2]
    h = jnp.maximum(h, 0.0).astype(dt)

    # Layer 2: block-diagonal [2H, 2H] keeps heads independent, single MXU push.
    h = jnp.dot(h, slab_ref[r_w2:r_w2 + h2, 0:h2],
                preferred_element_type=jnp.float32)
    h = h + slab_ref[r_b + 1:r_b + 2, 0:h2]
    h = jnp.maximum(h, 0.0).astype(dt)

    # Layer 3: lane-padded [2H, 128] -> lane 0 = q1, lane 1 = q2, rest zeros.
    q = jnp.dot(h, slab_ref[r_w3:r_w3 + h2, :],
                preferred_element_type=jnp.float32)
    q = q + slab_ref[r_b + 2:r_b + 3, :]
    out_ref[...] = q.astype(out_ref.dtype)


# ----------------------------------------------------------------------------
# Wrapper
# ----------------------------------------------------------------------------
def qnetwork_forward(state, action, packed, *, batch_tile=None):
    """Fused twin-Q forward. state: [B, S], action: [B, A]. Returns (q1, q2), each [B, 1]."""
    slab, dims = packed
    d_in, h2, lanes = dims["d_in"], dims["h2"], dims["lanes"]
    B = state.shape[0]
    assert state.shape[1] + action.shape[1] == d_in

    # Single concatenated activation operand (one DMA, one K=d_in MXU push).
    x = jnp.concatenate([state, action], axis=1).astype(slab.dtype)

    tb = B if batch_tile is None else batch_tile
    assert B % tb == 0, "batch must be divisible by batch_tile"
    nb = B // tb

    kernel = functools.partial(
        qnetwork_kernel, d_in=d_in, h2=h2,
        r_w1=dims["r_w1"], r_w2=dims["r_w2"], r_w3=dims["r_w3"], r_b=dims["r_b"])

    flops = 2 * B * (d_in * h2 + h2 * h2 + h2 * lanes)
    bytes_accessed = (
        B * d_in * jnp.dtype(slab.dtype).itemsize
        + math.prod(slab.shape) * jnp.dtype(slab.dtype).itemsize
        + B * lanes * 4)

    q = pl.pallas_call(
        kernel,
        out_shape=jax.ShapeDtypeStruct((B, lanes), jnp.float32),
        grid=(nb,),
        in_specs=[
            pl.BlockSpec((tb, d_in), lambda i: (i, 0)),        # activations
            pl.BlockSpec(slab.shape, lambda i: (0, 0)),        # pinned weight slab
        ],
        out_specs=pl.BlockSpec((tb, lanes), lambda i: (i, 0)),
        compiler_params=pltpu.CompilerParams(
            dimension_semantics=("parallel",)),
        cost_estimate=pl.CostEstimate(
            flops=flops, transcendentals=0, bytes_accessed=bytes_accessed),
    )(x, slab)

    return q[:, 0:1], q[:, 1:2]


# ----------------------------------------------------------------------------
# Parameter init (matches the PyTorch module) and one-shot slab packing.
# ----------------------------------------------------------------------------
def xavier_uniform(key, fan_in, fan_out, gain=1.0):
    # Matches torch.nn.init.xavier_uniform_ on a (fan_out, fan_in) weight;
    # stored transposed as [fan_in, fan_out].
    limit = gain * jnp.sqrt(6.0 / (fan_in + fan_out))
    return jax.random.uniform(
        key, (fan_in, fan_out), dtype=jnp.float32, minval=-limit, maxval=limit)


def init_qnetwork_params(key, num_state, num_action, hidden_dim):
    d_in = num_state + num_action
    keys = jax.random.split(key, 6)
    w1 = xavier_uniform(keys[0], d_in, hidden_dim)
    w2 = xavier_uniform(keys[1], hidden_dim, hidden_dim)
    w3 = xavier_uniform(keys[2], hidden_dim, 1)
    w4 = xavier_uniform(keys[3], d_in, hidden_dim)
    w5 = xavier_uniform(keys[4], hidden_dim, hidden_dim)
    w6 = xavier_uniform(keys[5], hidden_dim, 1)
    zH = lambda: jnp.zeros((1, hidden_dim), jnp.float32)
    z1 = lambda: jnp.zeros((1, 1), jnp.float32)
    # Biases are zero-initialized, matching weights_init_ (constant_(bias, 0)).
    return (w1, zH(), w2, zH(), w3, z1(), w4, zH(), w5, zH(), w6, z1())


def pack_qnetwork_params(params, compute_dtype=jnp.float32):
    """Fuse twin heads + pack every weight/bias into one pre-cast VMEM slab."""
    (w1, b1, w2, b2, w3, b3, w4, b4, w5, b5, w6, b6) = params
    d_in, H = w1.shape
    h2 = 2 * H
    lanes = _round_up(max(h2, 128), 128)

    # 8-row-aligned section offsets so in-kernel slices stay sublane aligned.
    r_w1 = 0
    r_w2 = _round_up(d_in, 8)
    r_w3 = r_w2 + _round_up(h2, 8)
    r_b = r_w3 + _round_up(h2, 8)
    rows = r_b + 8

    zeros_hh = jnp.zeros((H, H), jnp.float32)

    w1p = jnp.concatenate([w1, w4], axis=1)                            # [d_in, 2H]
    w2p = jnp.block([[w2, zeros_hh], [zeros_hh, w5]])                  # [2H, 2H]
    w3p = jnp.zeros((h2, lanes), jnp.float32)                          # [2H, lanes]
    w3p = w3p.at[:H, 0:1].set(w3)                                      # q1 -> lane 0
    w3p = w3p.at[H:, 1:2].set(w6)                                      # q2 -> lane 1

    b1p = jnp.concatenate([b1, b4], axis=1)[0]                         # [2H]
    b2p = jnp.concatenate([b2, b5], axis=1)[0]                         # [2H]
    b3p = jnp.zeros((lanes,), jnp.float32)
    b3p = b3p.at[0].set(b3[0, 0]).at[1].set(b6[0, 0])

    slab = jnp.zeros((rows, lanes), jnp.float32)
    slab = slab.at[r_w1:r_w1 + d_in, 0:h2].set(w1p)
    slab = slab.at[r_w2:r_w2 + h2, 0:h2].set(w2p)
    slab = slab.at[r_w3:r_w3 + h2, :].set(w3p)
    slab = slab.at[r_b, 0:h2].set(b1p)
    slab = slab.at[r_b + 1, 0:h2].set(b2p)
    slab = slab.at[r_b + 2, :].set(b3p)
    slab = slab.astype(compute_dtype)                                  # pre-cast once

    dims = dict(d_in=d_in, h2=h2, lanes=lanes,
                r_w1=r_w1, r_w2=r_w2, r_w3=r_w3, r_b=r_b)
    return slab, dims


# ----------------------------------------------------------------------------
# Pure-JAX reference with matching operand precision (f32 accumulation).
# ----------------------------------------------------------------------------
def qnetwork_reference(state, action, params, compute_dtype):
    (w1, b1, w2, b2, w3, b3, w4, b4, w5, b5, w6, b6) = params
    x = jnp.concatenate([state, action], axis=1)

    def linear(h, w, b):
        return jnp.dot(h.astype(compute_dtype), w.astype(compute_dtype),
                       preferred_element_type=jnp.float32) + b

    r1 = jnp.maximum(linear(x, w1, b1), 0.0)
    r1 = jnp.maximum(linear(r1, w2, b2), 0.0)
    r1 = linear(r1, w3, b3)
    r2 = jnp.maximum(linear(x, w4, b4), 0.0)
    r2 = jnp.maximum(linear(r2, w5, b5), 0.0)
    r2 = linear(r2, w6, b6)
    return r1, r2


if __name__ == "__main__":
    num_state, num_action, hidden_dim = 24, 8, 32
    batch = 8

    key = jax.random.PRNGKey(0)
    k_params, k_state, k_action = jax.random.split(key, 3)

    params = init_qnetwork_params(k_params, num_state, num_action, hidden_dim)
    state = jax.random.normal(k_state, (batch, num_state), dtype=jnp.float32)
    action = jax.random.normal(k_action, (batch, num_action), dtype=jnp.float32)

    # Primary path: f32 end-to-end (default compute dtype), single grid step.
    packed_f32 = pack_qnetwork_params(params, compute_dtype=jnp.float32)
    q1, q2 = qnetwork_forward(state, action, packed_f32)
    jax.block_until_ready((q1, q2))
    r1, r2 = qnetwork_reference(state, action, params, jnp.float32)
    assert q1.shape == (batch, 1) and q2.shape == (batch, 1)
    assert jnp.allclose(q1, r1, atol=1e-5), "q1 mismatch (f32 path)"
    assert jnp.allclose(q2, r2, atol=1e-5), "q2 mismatch (f32 path)"

    # Larger-batch path: batch grid, parallel semantics (feeds both v7x TCs).
    b_big = 64
    ks2, ka2 = jax.random.split(jax.random.PRNGKey(1))
    state_b = jax.random.normal(ks2, (b_big, num_state), dtype=jnp.float32)
    action_b = jax.random.normal(ka2, (b_big, num_action), dtype=jnp.float32)
    q1b, q2b = qnetwork_forward(state_b, action_b, packed_f32, batch_tile=32)
    jax.block_until_ready((q1b, q2b))
    r1b, r2b = qnetwork_reference(state_b, action_b, params, jnp.float32)
    assert jnp.allclose(q1b, r1b, atol=1e-5), "q1 mismatch (batched grid path)"
    assert jnp.allclose(q2b, r2b, atol=1e-5), "q2 mismatch (batched grid path)"

    # Optional bf16-weight path (slab pre-cast once; no per-call converts).
    packed_bf16 = pack_qnetwork_params(params, compute_dtype=jnp.bfloat16)
    q1h, q2h = qnetwork_forward(state, action, packed_bf16)
    jax.block_until_ready((q1h, q2h))
    r1h, r2h = qnetwork_reference(state, action, params, jnp.bfloat16)
    assert jnp.allclose(q1h, r1h, atol=1e-2), "q1 mismatch (bf16 path)"
    assert jnp.allclose(q2h, r2h, atol=1e-2), "q2 mismatch (bf16 path)"

    print("KERNEL_OK")
</pallas_src>

<mosaic_0001>
module attributes {stable_mosaic.version = 11 : i64} {
  func.func @qnetwork_kernel(%arg0: i32, %arg1: memref<8x32xf32, #tpu.memory_space<vmem>>, %arg2: memref<168x128xf32, #tpu.memory_space<vmem>>, %arg3: memref<8x128xf32, #tpu.memory_space<vmem>>) attributes {dimension_semantics = [#tpu.dimension_semantics<parallel>], iteration_bounds = array<i64: 1>, scalar_prefetch = 0 : i64, scratch_operands = 0 : i64, tpu.core_type = #tpu.core_type<tc>, window_params = [{transform_indices = @transform_0, window_bounds = array<i64: 8, 32>}, {pipeline_mode = #tpu.pipeline_mode<synchronous>, transform_indices = @transform_1, window_bounds = array<i64: 168, 128>}, {transform_indices = @transform_2, window_bounds = array<i64: 8, 128>}]} {
    %c0 = arith.constant 0 : index
    %c0_0 = arith.constant 0 : index
    %0 = vector.load %arg1[%c0, %c0_0] : memref<8x32xf32, #tpu.memory_space<vmem>>, vector<8x32xf32>
    %c0_1 = arith.constant 0 : index
    %c0_2 = arith.constant 0 : index
    %1 = vector.load %arg2[%c0_1, %c0_2] : memref<168x128xf32, #tpu.memory_space<vmem>>, vector<32x64xf32>
    %cst = arith.constant dense<0.000000e+00> : vector<8x64xf32>
    %2 = tpu.matmul %0, %1, %cst {dimension_numbers = #tpu.dot_dimension_numbers<[1], [0], [0], [1], [0, 0, 1, 1], [], []>} : vector<8x32xf32>, vector<32x64xf32>, vector<8x64xf32> -> vector<8x64xf32>
    %c160 = arith.constant 160 : index
    %c0_3 = arith.constant 0 : index
    %3 = vector.load %arg2[%c160, %c0_3] : memref<168x128xf32, #tpu.memory_space<vmem>>, vector<1x64xf32>
    %4 = vector.broadcast %3 : vector<1x64xf32> to vector<8x64xf32>
    %5 = arith.addf %2, %4 : vector<8x64xf32>
    %cst_4 = arith.constant 0.000000e+00 : f32
    %6 = vector.broadcast %cst_4 : f32 to vector<8x64xf32>
    %7 = arith.maximumf %5, %6 : vector<8x64xf32>
    %c32 = arith.constant 32 : index
    %c0_5 = arith.constant 0 : index
    %8 = vector.load %arg2[%c32, %c0_5] : memref<168x128xf32, #tpu.memory_space<vmem>>, vector<64x64xf32>
    %cst_6 = arith.constant dense<0.000000e+00> : vector<8x64xf32>
    %9 = tpu.matmul %7, %8, %cst_6 {dimension_numbers = #tpu.dot_dimension_numbers<[1], [0], [0], [1], [0, 0, 1, 1], [], []>} : vector<8x64xf32>, vector<64x64xf32>, vector<8x64xf32> -> vector<8x64xf32>
    %c161 = arith.constant 161 : index
    %c0_7 = arith.constant 0 : index
    %10 = vector.load %arg2[%c161, %c0_7] : memref<168x128xf32, #tpu.memory_space<vmem>>, vector<1x64xf32>
    %11 = vector.broadcast %10 : vector<1x64xf32> to vector<8x64xf32>
    %12 = arith.addf %9, %11 : vector<8x64xf32>
    %cst_8 = arith.constant 0.000000e+00 : f32
    %13 = vector.broadcast %cst_8 : f32 to vector<8x64xf32>
    %14 = arith.maximumf %12, %13 : vector<8x64xf32>
    %c96 = arith.constant 96 : index
    %c0_9 = arith.constant 0 : index
    %15 = vector.load %arg2[%c96, %c0_9] : memref<168x128xf32, #tpu.memory_space<vmem>>, vector<64x128xf32>
    %cst_10 = arith.constant dense<0.000000e+00> : vector<8x128xf32>
    %16 = tpu.matmul %14, %15, %cst_10 {dimension_numbers = #tpu.dot_dimension_numbers<[1], [0], [0], [1], [0, 0, 1, 1], [], []>} : vector<8x64xf32>, vector<64x128xf32>, vector<8x128xf32> -> vector<8x128xf32>
    %c162 = arith.constant 162 : index
    %c0_11 = arith.constant 0 : index
    %17 = vector.load %arg2[%c162, %c0_11] : memref<168x128xf32, #tpu.memory_space<vmem>>, vector<1x128xf32>
    %18 = vector.broadcast %17 : vector<1x128xf32> to vector<8x128xf32>
    %19 = arith.addf %16, %18 : vector<8x128xf32>
    %c0_12 = arith.constant 0 : index
    %c0_13 = arith.constant 0 : index
    %20 = vector.load %arg3[%c0_12, %c0_13] : memref<8x128xf32, #tpu.memory_space<vmem>>, vector<8x128xf32>
    tpu.vector_store %arg3[%c0_12, %c0_13], %19 {strides = array<i32>} : memref<8x128xf32, #tpu.memory_space<vmem>>, vector<8x128xf32>,
    return
  }
  func.func @transform_0(%arg0: i32) -> (i32, i32) {
    %c0_i32 = arith.constant 0 : i32
    %c0_i32_0 = arith.constant 0 : i32
    return %arg0, %c0_i32 : i32, i32
  }
  func.func @transform_1(%arg0: i32) -> (i32, i32) {
    %c0_i32 = arith.constant 0 : i32
    %c0_i32_0 = arith.constant 0 : i32
    %c0_i32_1 = arith.constant 0 : i32
    return %c0_i32, %c0_i32_0 : i32, i32
  }
  func.func @transform_2(%arg0: i32) -> (i32, i32) {
    %c0_i32 = arith.constant 0 : i32
    %c0_i32_0 = arith.constant 0 : i32
    return %arg0, %c0_i32 : i32, i32
  }
}

</mosaic_0001>

<llo_original>
// kernel: tpu_custom_call.1
$region0: #{tpu_custom_call.1}
  #allocation0 [shape = 'u32[]', space=smem, size = 0x4, offset = 0x4, fixed_abs, tag = 'smem constant byte address 0x4 - core index']
  #allocation1 [shape = 'u32[144,128]{1,0:T(1,128)}', space=vmem, size = 0x12000, scoped, tag = 'internal scratch']
  %s0 = inlined_call_operand.hbm [shape: f32[8,32], index: 0, kind: input, shape index: {}]
  %s1 = inlined_call_operand.hbm [shape: f32[168,128], index: 1, kind: input, shape index: {}]
  %s2 = inlined_call_operand.hbm [shape: f32[8,128], index: 2, kind: output, shape index: {}]
  %s3 = sld [smem:[#allocation0]]
  $region26: #{tpu_custom_call.1} parent=0
    _
  %s5 = ssub.s32 1, %s3
  %s6 = scalar_select 0, %s5, %s3
  $region1: #{tpu_custom_call.1} parent=0
    #allocation2 [shape = 'u8[4096]{0}', space=vmem, size = 0x1000, scoped, tag = 'input window, operand 0, single buffered']
    #allocation3 [shape = 's32[1]{0}', space=sflag, size = 0x4, scoped, tag = 'scoped memory for tpu_custom_call.1']
    #allocation4 [shape = 's32[1]{0}', space=sflag, size = 0x4, scoped, tag = 'scoped memory for tpu_custom_call.1']
    #allocation5 [shape = 'u8[86016]{0}', space=vmem, size = 0x15000, scoped, tag = 'input window, operand 1, single buffered']
    #allocation6 [shape = 's32[1]{0}', space=sflag, size = 0x4, scoped, tag = 'scoped memory for tpu_custom_call.1']
    #allocation7 [shape = 'u8[4096]{0}', space=vmem, size = 0x1000, scoped, tag = 'output window, operand 0, single buffered']
    %7 = vsyncpa [#allocation3], 0
    %8 = vsyncpa [#allocation6], 0
    %9 = vsyncpa [#allocation4], 0
    // Predicated region
    $region2: #{tpu_custom_call.1} parent=1 // pred_check
      _
    $region3: #{tpu_custom_call.1} parent=1 // pred_check_branch
      %11 = sbr.rel (0) target = $region5
    $region4: #{tpu_custom_call.1} parent=1 // pred_region
      %s13 = ssub.s32 128, 128
      %14 = vsyncadd [#allocation3], %s13
      %s16 = sshll.u32 [#allocation2], 4
      %s17 = int_to_ptr.vmem [resolvable:$true] %s16
      %19 = dma.hbm_to_vmem [thread:$0]  %s0, 128, %s17, [#allocation3]
    $region5: #{tpu_custom_call.1} parent=1 // pred_fallthru
      _
    // Predicated region
    $region6: #{tpu_custom_call.1} parent=1 // pred_check
      _
    $region7: #{tpu_custom_call.1} parent=1 // pred_check_branch
      %21 = sbr.rel (0) target = $region9
    $region8: #{tpu_custom_call.1} parent=1 // pred_region
      %s23 = ssub.s32 2688, 2688
      %24 = vsyncadd [#allocation6], %s23
      %s25 = sshll.u32 [#allocation5], 4
      %s26 = int_to_ptr.vmem [resolvable:$true] %s25
      %31 = dma.hbm_to_vmem [thread:$0]  %s1, 2688, %s26, [#allocation6], 128, 128, 8
    $region9: #{tpu_custom_call.1} parent=1 // pred_fallthru
      _
    // Predicated region
    $region10: #{tpu_custom_call.1} parent=1 // pred_check
      _
    $region11: #{tpu_custom_call.1} parent=1 // pred_check_branch
      %33 = sbr.rel (0) target = $region13
    $region12: #{tpu_custom_call.1} parent=1 // pred_region
      %34 = dma.done [#allocation3], 128
    $region13: #{tpu_custom_call.1} parent=1 // pred_fallthru
      _
    // Predicated region
    $region14: #{tpu_custom_call.1} parent=1 // pred_check
      _
    $region15: #{tpu_custom_call.1} parent=1 // pred_check_branch
      %36 = sbr.rel (0) target = $region17
    $region16: #{tpu_custom_call.1} parent=1 // pred_region
      %37 = dma.done [#allocation6], 2688
    $region17: #{tpu_custom_call.1} parent=1 // pred_fallthru
      _
    %v38 = vld [vmem:[#allocation2] sm:$0xff]
    %v39 = vld [vmem:[#allocation5] sm:$0xff]
    %v40 = vld [vmem:[#allocation5 + $0x8] sm:$0xff]
    %v41 = vld [vmem:[#allocation5 + $0x10] sm:$0xff]
    %v42 = vld [vmem:[#allocation5 + $0x18] sm:$0xff]
    %v43 = vld [vmem:[#allocation5 + $0xa0] sm:$0x1]
    %v44 = vlaneseq
    %v45 = vshrl.u32 %v44, 7
    %v46 = vsub.s32 0, %v45
    %v47 = vrot.slane %v43, %v46
    %vm48 = vcmask 261120
    %v50 = vsel %vm48, %v38, 0
    %52 = vmatprep.subr.mxu0 0.0
    %53 = vmatpush1.msra.mxu0 %v39
    %54 = vmatprep.subr.mxu0 0.0
    %55 = vmatpush1.msra.mxu0 %v40
    %56 = vmatprep.subr.mxu0 0.0
    %57 = vmatpush1.msra.mxu0 %v41
    %58 = vmatprep.subr.mxu0 0.0
    %59 = vmatpush1.msra.mxu0 %v42
    %60 = vmatprep.subr.mxu0 0.0
    %61 = vmatpush1.msra.mxu0 0.0
    %62 = vmatprep.subr.mxu0 0.0
    %63 = vmatpush1.msra.mxu0 0.0
    %64 = vmatprep.subr.mxu0 0.0
    %65 = vmatpush1.msra.mxu0 0.0
    %66 = vmatprep.subr.mxu0 0.0
    %67 = vmatpush1.msra.mxu0 0.0
    %68 = vmatprep.subr.mxu0 0.0
    %69 = vmatpush1.msra.mxu0 0.0
    %70 = vmatprep.subr.mxu0 0.0
    %71 = vmatpush1.msra.mxu0 0.0
    %72 = vmatprep.subr.mxu0 0.0
    %73 = vmatpush1.msra.mxu0 0.0
    %74 = vmatprep.subr.mxu0 0.0
    %75 = vmatpush1.msra.mxu0 0.0
    %76 = vmatprep.subr.mxu0 0.0
    %77 = vmatpush1.msra.mxu0 0.0
    %78 = vmatprep.subr.mxu0 0.0
    %79 = vmatpush1.msra.mxu0 0.0
    %80 = vmatprep.subr.mxu0 0.0
    %81 = vmatpush1.msra.mxu0 0.0
    %82 = vmatprep.subr.mxu0 0.0
    %83 = vmatpush1.msra.mxu0 0.0
    %84 = vmatprep.subr.mxu0 0.0
    %85 = vmatpush1.msra.mxu0 0.0
    %86 = vmatprep.subr.mxu0 0.0
    %87 = vmatpush1.msra.mxu0 0.0
    %88 = vmatprep.subr.mxu0 0.0
    %89 = vmatpush1.msra.mxu0 0.0
    %90 = vmatprep.subr.mxu0 0.0
    %91 = vmatpush1.msra.mxu0 0.0
    %92 = vmatprep.subr.mxu0 0.0
    %93 = vmatpush1.msra.mxu0 0.0
    %94 = vmatprep.subr.mxu0 0.0
    %95 = vmatpush1.msra.mxu0 0.0
    %96 = vmatprep.subr.mxu0 0.0
    %97 = vmatpush1.msra.mxu0 0.0
    %98 = vmatprep.subr.mxu0 0.0
    %99 = vmatpush1.msra.mxu0 0.0
    %100 = vmatprep.subr.mxu0 0.0
    %101 = vmatpush1.msra.mxu0 0.0
    %102 = vmatprep.subr.mxu0 0.0
    %103 = vmatpush1.msra.mxu0 0.0
    %104 = vmatprep.subr.mxu0 0.0
    %105 = vmatpush1.msra.mxu0 0.0
    %106 = vmatprep.subr.mxu0 0.0
    %107 = vmatpush1.msra.mxu0 0.0
    %108 = vmatprep.subr.mxu0 0.0
    %109 = vmatpush1.msra.mxu0 0.0
    %110 = vmatprep.subr.mxu0 0.0
    %111 = vmatpush1.msra.mxu0 0.0
    %112 = vmatprep.subr.mxu0 0.0
    %113 = vmatpush1.msra.mxu0 0.0
    %114 = vmatprep.subr.mxu0 0.0
    %115 = vmatpush1.msra.mxu0 0.0
    %116 = vmatprep.mubr.f32.mxu0 0.0
    %117 = vmatmul.mubr.f32.gmra.mrb[0].mxu0 %v50
    %v118 = vpop.f32.mrb[0].mxu0
    %v119 = vadd.f32 %v47, %v118
    %v120 = vpop.f32.mrb[0].mxu0
    %121 = vdwg.mxu0
    %v122 = vmax.f32 %v119, 0.0
    %v123 = vld [vmem:[#allocation5 + $0x20] sm:$0xff]
    %v124 = vld [vmem:[#allocation5 + $0x28] sm:$0xff]
    %v125 = vld [vmem:[#allocation5 + $0x30] sm:$0xff]
    %v126 = vld [vmem:[#allocation5 + $0x38] sm:$0xff]
    %v127 = vld [vmem:[#allocation5 + $0x40] sm:$0xff]
    %v128 = vld [vmem:[#allocation5 + $0x48] sm:$0xff]
    %v129 = vld [vmem:[#allocation5 + $0x50] sm:$0xff]
    %v130 = vld [vmem:[#allocation5 + $0x58] sm:$0xff]
    %v131 = vld [vmem:[#allocation5 + $0xa1] sm:$0x1]
    %v132 = vlaneseq
    %v133 = vshrl.u32 %v132, 7
    %v134 = vsub.s32 0, %v133
    %v135 = vrot.slane %v131, %v134
    %vm136 = vcmask 523264
    %v138 = vsel %vm136, %v122, 0
    %140 = vmatprep.subr.mxu0 0.0
    %141 = vmatpush1.msra.mxu0 %v123
    %142 = vmatprep.subr.mxu0 0.0
    %143 = vmatpush1.msra.mxu0 %v124
    %144 = vmatprep.subr.mxu0 0.0
    %145 = vmatpush1.msra.mxu0 %v125
    %146 = vmatprep.subr.mxu0 0.0
    %147 = vmatpush1.msra.mxu0 %v126
    %148 = vmatprep.subr.mxu0 0.0
    %149 = vmatpush1.msra.mxu0 %v127
    %150 = vmatprep.subr.mxu0 0.0
    %151 = vmatpush1.msra.mxu0 %v128
    %152 = vmatprep.subr.mxu0 0.0
    %153 = vmatpush1.msra.mxu0 %v129
    %154 = vmatprep.subr.mxu0 0.0
    %155 = vmatpush1.msra.mxu0 %v130
    %156 = vmatprep.subr.mxu0 0.0
    %157 = vmatpush1.msra.mxu0 0.0
    %158 = vmatprep.subr.mxu0 0.0
    %159 = vmatpush1.msra.mxu0 0.0
    %160 = vmatprep.subr.mxu0 0.0
    %161 = vmatpush1.msra.mxu0 0.0
    %162 = vmatprep.subr.mxu0 0.0
    %163 = vmatpush1.msra.mxu0 0.0
    %164 = vmatprep.subr.mxu0 0.0
    %165 = vmatpush1.msra.mxu0 0.0
    %166 = vmatprep.subr.mxu0 0.0
    %167 = vmatpush1.msra.mxu0 0.0
    %168 = vmatprep.subr.mxu0 0.0
    %169 = vmatpush1.msra.mxu0 0.0
    %170 = vmatprep.subr.mxu0 0.0
    %171 = vmatpush1.msra.mxu0 0.0
    %172 = vmatprep.subr.mxu0 0.0
    %173 = vmatpush1.msra.mxu0 0.0
    %174 = vmatprep.subr.mxu0 0.0
    %175 = vmatpush1.msra.mxu0 0.0
    %176 = vmatprep.subr.mxu0 0.0
    %177 = vmatpush1.msra.mxu0 0.0
    %178 = vmatprep.subr.mxu0 0.0
    %179 = vmatpush1.msra.mxu0 0.0
    %180 = vmatprep.subr.mxu0 0.0
    %181 = vmatpush1.msra.mxu0 0.0
    %182 = vmatprep.subr.mxu0 0.0
    %183 = vmatpush1.msra.mxu0 0.0
    %184 = vmatprep.subr.mxu0 0.0
    %185 = vmatpush1.msra.mxu0 0.0
    %186 = vmatprep.subr.mxu0 0.0
    %187 = vmatpush1.msra.mxu0 0.0
    %188 = vmatprep.subr.mxu0 0.0
    %189 = vmatpush1.msra.mxu0 0.0
    %190 = vmatprep.subr.mxu0 0.0
    %191 = vmatpush1.msra.mxu0 0.0
    %192 = vmatprep.subr.mxu0 0.0
    %193 = vmatpush1.msra.mxu0 0.0
    %194 = vmatprep.subr.mxu0 0.0
    %195 = vmatpush1.msra.mxu0 0.0
    %196 = vmatprep.subr.mxu0 0.0
    %197 = vmatpush1.msra.mxu0 0.0
    %198 = vmatprep.subr.mxu0 0.0
    %199 = vmatpush1.msra.mxu0 0.0
    %200 = vmatprep.subr.mxu0 0.0
    %201 = vmatpush1.msra.mxu0 0.0
    %202 = vmatprep.subr.mxu0 0.0
    %203 = vmatpush1.msra.mxu0 0.0
    %204 = vmatprep.mubr.f32.mxu0 0.0
    %205 = vmatmul.mubr.f32.gmra.mrb[0].mxu0 %v138
    %v206 = vpop.f32.mrb[0].mxu0
    %v207 = vadd.f32 %v135, %v206
    %v208 = vpop.f32.mrb[0].mxu0
    %209 = vdwg.mxu0
    %v210 = vmax.f32 %v207, 0.0
    %v211 = vld [vmem:[#allocation5 + $0x60] sm:$0xff]
    %v212 = vld [vmem:[#allocation5 + $0x68] sm:$0xff]
    %v213 = vld [vmem:[#allocation5 + $0x70] sm:$0xff]
    %v214 = vld [vmem:[#allocation5 + $0x78] sm:$0xff]
    %v215 = vld [vmem:[#allocation5 + $0x80] sm:$0xff]
    %v216 = vld [vmem:[#allocation5 + $0x88] sm:$0xff]
    %v217 = vld [vmem:[#allocation5 + $0x90] sm:$0xff]
    %v218 = vld [vmem:[#allocation5 + $0x98] sm:$0xff]
    %v219 = vld [vmem:[#allocation5 + $0xa2] sm:$0x1]
    %v220 = vlaneseq
    %v221 = vshrl.u32 %v220, 7
    %v222 = vsub.s32 0, %v221
    %v223 = vrot.slane %v219, %v222
    %v225 = vsel %vm136, %v210, 0
    %227 = vmatprep.subr.mxu0 0.0
    %228 = vmatpush1.msra.mxu0 %v211
    %229 = vmatprep.subr.mxu0 0.0
    %230 = vmatpush1.msra.mxu0 %v212
    %231 = vmatprep.subr.mxu0 0.0
    %232 = vmatpush1.msra.mxu0 %v213
    %233 = vmatprep.subr.mxu0 0.0
    %234 = vmatpush1.msra.mxu0 %v214
    %235 = vmatprep.subr.mxu0 0.0
    %236 = vmatpush1.msra.mxu0 %v215
    %237 = vmatprep.subr.mxu0 0.0
    %238 = vmatpush1.msra.mxu0 %v216
    %239 = vmatprep.subr.mxu0 0.0
    %240 = vmatpush1.msra.mxu0 %v217
    %241 = vmatprep.subr.mxu0 0.0
    %242 = vmatpush1.msra.mxu0 %v218
    %243 = vmatprep.subr.mxu0 0.0
    %244 = vmatpush1.msra.mxu0 0.0
    %245 = vmatprep.subr.mxu0 0.0
    %246 = vmatpush1.msra.mxu0 0.0
    %247 = vmatprep.subr.mxu0 0.0
    %248 = vmatpush1.msra.mxu0 0.0
    %249 = vmatprep.subr.mxu0 0.0
    %250 = vmatpush1.msra.mxu0 0.0
    %251 = vmatprep.subr.mxu0 0.0
    %252 = vmatpush1.msra.mxu0 0.0
    %253 = vmatprep.subr.mxu0 0.0
    %254 = vmatpush1.msra.mxu0 0.0
    %255 = vmatprep.subr.mxu0 0.0
    %256 = vmatpush1.msra.mxu0 0.0
    %257 = vmatprep.subr.mxu0 0.0
    %258 = vmatpush1.msra.mxu0 0.0
    %259 = vmatprep.subr.mxu0 0.0
    %260 = vmatpush1.msra.mxu0 0.0
    %261 = vmatprep.subr.mxu0 0.0
    %262 = vmatpush1.msra.mxu0 0.0
    %263 = vmatprep.subr.mxu0 0.0
    %264 = vmatpush1.msra.mxu0 0.0
    %265 = vmatprep.subr.mxu0 0.0
    %266 = vmatpush1.msra.mxu0 0.0
    %267 = vmatprep.subr.mxu0 0.0
    %268 = vmatpush1.msra.mxu0 0.0
    %269 = vmatprep.subr.mxu0 0.0
    %270 = vmatpush1.msra.mxu0 0.0
    %271 = vmatprep.subr.mxu0 0.0
    %272 = vmatpush1.msra.mxu0 0.0
    %273 = vmatprep.subr.mxu0 0.0
    %274 = vmatpush1.msra.mxu0 0.0
    %275 = vmatprep.subr.mxu0 0.0
    %276 = vmatpush1.msra.mxu0 0.0
    %277 = vmatprep.subr.mxu0 0.0
    %278 = vmatpush1.msra.mxu0 0.0
    %279 = vmatprep.subr.mxu0 0.0
    %280 = vmatpush1.msra.mxu0 0.0
    %281 = vmatprep.subr.mxu0 0.0
    %282 = vmatpush1.msra.mxu0 0.0
    %283 = vmatprep.subr.mxu0 0.0
    %284 = vmatpush1.msra.mxu0 0.0
    %285 = vmatprep.subr.mxu0 0.0
    %286 = vmatpush1.msra.mxu0 0.0
    %287 = vmatprep.subr.mxu0 0.0
    %288 = vmatpush1.msra.mxu0 0.0
    %289 = vmatprep.subr.mxu0 0.0
    %290 = vmatpush1.msra.mxu0 0.0
    %291 = vmatprep.mubr.f32.mxu0 0.0
    %292 = vmatmul.mubr.f32.gmra.mrb[0].mxu0 %v225
    %v293 = vpop.f32.mrb[0].mxu0
    %v294 = vadd.f32 %v223, %v293
    %v295 = vpop.f32.mrb[0].mxu0
    %296 = vdwg.mxu0
    %297 = vst [vmem:[#allocation7] sm:$0xff] %v294
    // Predicated region
    $region18: #{tpu_custom_call.1} parent=1 // pred_check
      _
    $region19: #{tpu_custom_call.1} parent=1 // pred_check_branch
      %299 = sbr.rel (0) target = $region21
    $region20: #{tpu_custom_call.1} parent=1 // pred_region
      %s301 = ssub.s32 128, 128
      %302 = vsyncadd [#allocation4], %s301
      %s304 = sshll.u32 [#allocation7], 4
      %s305 = int_to_ptr.vmem [resolvable:$true] %s304
      %307 = dma.vmem_to_hbm [thread:$0]  %s305, 128, %s2, [#allocation4]
    $region21: #{tpu_custom_call.1} parent=1 // pred_fallthru
      _
    // Predicated region
    $region22: #{tpu_custom_call.1} parent=1 // pred_check
      _
    $region23: #{tpu_custom_call.1} parent=1 // pred_check_branch
      %309 = sbr.rel (0) target = $region25
    $region24: #{tpu_custom_call.1} parent=1 // pred_region
      %310 = dma.done [#allocation4], 128
    $region25: #{tpu_custom_call.1} parent=1 // pred_fallthru
      _
    %311 = vsyncpa [#allocation3], 1
    %312 = vsyncpa [#allocation6], 1
    %313 = vsyncpa [#allocation4], 1

</llo_original>
